<compile_context>
chip_gen: v5e
topology: v5e:2x2
jax: 0.10.0
libtpu: 0.0.40
codegen_flags: <defaults>
</compile_context>

<pallas_src>
import functools

import jax
import jax.numpy as jnp
from jax.experimental import pallas as pl
from jax.experimental.pallas import tpu as pltpu

_LANE = 128            # vreg lane width
_SUB = 8               # f32 sublane count
_MIN_GRID_STEPS = 4    # keep >= 2 grid steps per TensorCore (v7x megacore)


def _round_up(n, m):
    return ((n + m - 1) // m) * m


def _vmem_capacity_bytes():
    """Physical VMEM of the current TPU generation (fallback: v7x per-core)."""
    try:
        return int(pltpu.get_tpu_info().vmem_capacity_bytes)
    except Exception:
        return 64 << 20


def ffn_kernel(x_ref, w1_ref, b1_ref, w2_ref, b2_ref, o_ref):
    # Cast x on the VMEM tile (no wrapper-side cast/pad pass over HBM).
    x = x_ref[...].astype(w1_ref.dtype)

    # Hidden layer: Linear (MXU, f32 accumulate) + bias + ReLU (VPU, f32).
    h = jnp.dot(x, w1_ref[...], preferred_element_type=jnp.float32)
    h = jnp.maximum(h + b1_ref[...], 0.0)          # (TB, Hp) + (1, Hp)

    # Output layer: Linear (MXU) + bias + Sigmoid (EUP), epilogue in f32.
    h = h.astype(w2_ref.dtype)                     # bf16 feed when enabled
    z = jnp.dot(h, w2_ref[...], preferred_element_type=jnp.float32)
    z = z + b2_ref[...]                            # (TB, C) + (1, C)
    o_ref[...] = jax.nn.sigmoid(z).astype(o_ref.dtype)


@functools.partial(
    jax.jit, static_argnames=("tb", "vmem_limit", "single_buffer_weights"))
def _pallas_ffn(x, w1p, b1p, w2p, b2p, *, tb, vmem_limit, single_buffer_weights):
    B, F = x.shape
    Hp = w1p.shape[1]
    C = w2p.shape[1]
    w_itemsize = jnp.dtype(w1p.dtype).itemsize

    # Resident (block index never changes); optionally single-buffered.
    res_kwargs = (
        dict(pipeline_mode=pl.Buffered(1)) if single_buffer_weights else {})

    grid = (pl.cdiv(B, tb),)

    cost = pl.CostEstimate(
        flops=2 * B * (F * Hp + Hp * C),
        transcendentals=B * C,                      # sigmoid
        bytes_accessed=(x.size * x.dtype.itemsize
                        + (w1p.size + w2p.size) * w_itemsize
                        + (b1p.size + b2p.size) * 4
                        + B * C * 4),
    )

    return pl.pallas_call(
        ffn_kernel,
        out_shape=jax.ShapeDtypeStruct((B, C), jnp.float32),
        grid_spec=pl.GridSpec(
            grid=grid,
            in_specs=[
                # x: batch-tiled, true F width (full-extent last dim), f32.
                pl.BlockSpec((tb, F), lambda i: (i, 0)),
                # Weights / biases: resident in VMEM for the whole grid.
                pl.BlockSpec((F, Hp), lambda i: (0, 0), **res_kwargs),
                pl.BlockSpec((1, Hp), lambda i: (0, 0), **res_kwargs),
                pl.BlockSpec((Hp, C), lambda i: (0, 0), **res_kwargs),
                pl.BlockSpec((1, C), lambda i: (0, 0), **res_kwargs),
            ],
            # Output at its true width C (no padded lanes, no post-slice).
            out_specs=pl.BlockSpec((tb, C), lambda i: (i, 0)),
        ),
        compiler_params=pltpu.CompilerParams(
            dimension_semantics=("parallel",),      # megacore on v7x
            vmem_limit_bytes=vmem_limit),
        cost_estimate=cost,
    )(x, w1p, b1p, w2p, b2p)


def ffn_forward(x, w1p, b1p, w2p, b2p, *, block_b=1024):
    """x: (B, F) float32; params from prepare_ffn_params.

    Returns (B, C) float32 probabilities in [0, 1].
    """
    B, F = x.shape
    Fw, Hp = w1p.shape
    C = w2p.shape[1]
    assert Fw == F, "x feature dim must match prepared w1"
    w_itemsize = jnp.dtype(w1p.dtype).itemsize

    # Generation-aware VMEM budget (75% of physical).
    vmem_limit = int(0.75 * _vmem_capacity_bytes())

    # Conservative VMEM accounting: double-buffered weight copies (default
    # pipeliner), double-buffered x/out tiles, plus the f32 hidden activation
    # and its cast copy, plus the pre-sigmoid logits.
    resident = 2 * ((F * Hp + Hp * C) * w_itemsize + (Hp + C) * 4)

    def tile_bytes(tb):
        x_io = 2 * tb * F * 4                       # double-buffered f32 x
        o_io = 2 * tb * C * 4                       # double-buffered f32 out
        work = tb * Hp * (4 + w_itemsize) + tb * C * 4
        return x_io + o_io + work

    # TODO(synk): if `resident` alone exceeds vmem_limit (very large F/H,
    # worst on v7x's 64 MiB), fall back to tiling the contraction dims with a
    # VMEM accumulator instead of fully-resident weights.

    # Batch tile: as large as VMEM allows (big tiles -> ~85% of HBM roofline),
    # but keep >= _MIN_GRID_STEPS grid steps for megacore + DMA/compute overlap.
    cap = max(_SUB, _round_up(pl.cdiv(B, _MIN_GRID_STEPS), _SUB))
    tb = max(_SUB, (min(block_b, cap) // _SUB) * _SUB)
    while tb > _SUB and resident + tile_bytes(tb) > vmem_limit:
        tb -= _SUB

    try:
        return _pallas_ffn(x, w1p, b1p, w2p, b2p, tb=tb,
                           vmem_limit=vmem_limit, single_buffer_weights=True)
    except Exception:
        # jax version without BlockSpec pipeline_mode support: fall back to
        # the default double-buffered resident specs.
        return _pallas_ffn(x, w1p, b1p, w2p, b2p, tb=tb,
                           vmem_limit=vmem_limit, single_buffer_weights=False)


def prepare_ffn_params(w1, b1, w2, b2, *, use_bf16=True):
    """Pad the hidden dim and cast the weights ONCE (init time, not per call).

    Zero-padded hidden columns/rows contribute nothing: padded h columns are
    ReLU(0 + 0) = 0 and multiply zero rows of w2.  F and C keep true widths.
    """
    F, H = w1.shape
    C = w2.shape[1]
    # 256-alignment fills the 2x256 MXU on v6e/v7x for non-toy hidden sizes;
    # 128 suffices for v5e's 4x128 MXU and for small H.
    h_align = 256 if H >= 256 else _LANE
    Hp = _round_up(H, h_align)
    mm_dtype = jnp.bfloat16 if use_bf16 else jnp.float32

    w1p = jnp.pad(w1, ((0, 0), (0, Hp - H))).astype(mm_dtype)
    w2p = jnp.pad(w2, ((0, Hp - H), (0, 0))).astype(mm_dtype)
    b1p = jnp.pad(b1.reshape(1, -1), ((0, 0), (0, Hp - H))).astype(jnp.float32)
    b2p = b2.reshape(1, -1).astype(jnp.float32)
    return w1p, b1p, w2p, b2p


def init_ffn_params(key, n_features, hidden, n_classes):
    """Deterministic init matching nn.Linear default (uniform +/- 1/sqrt(fan_in)).

    Weights stored as (in, out) = transpose of PyTorch's (out, in) layout.
    """
    k1, k2, k3, k4 = jax.random.split(key, 4)
    bound1 = 1.0 / jnp.sqrt(n_features)
    bound2 = 1.0 / jnp.sqrt(hidden)
    w1 = jax.random.uniform(k1, (n_features, hidden), jnp.float32,
                            minval=-bound1, maxval=bound1)
    b1 = jax.random.uniform(k2, (1, hidden), jnp.float32,
                            minval=-bound1, maxval=bound1)
    w2 = jax.random.uniform(k3, (hidden, n_classes), jnp.float32,
                            minval=-bound2, maxval=bound2)
    b2 = jax.random.uniform(k4, (1, n_classes), jnp.float32,
                            minval=-bound2, maxval=bound2)
    return w1, b1, w2, b2


if __name__ == "__main__":
    # TODO(synk): training (fit / BCELoss / RMSprop) and predict thresholding
    # are host-side logic, not kernels; only the forward pass is implemented.
    key = jax.random.PRNGKey(0)
    kx, kp = jax.random.split(key)

    batch, n_features, hidden, n_classes = 64, 32, 64, 4
    x = jax.random.normal(kx, (batch, n_features), jnp.float32)
    w1, b1, w2, b2 = init_ffn_params(kp, n_features, hidden, n_classes)

    # Pure-JAX reference.
    ref = jax.nn.sigmoid(jnp.maximum(x @ w1 + b1, 0.0) @ w2 + b2)

    # f32 matmul path: exact semantics of the PyTorch f32 module.
    p32 = prepare_ffn_params(w1, b1, w2, b2, use_bf16=False)
    out_f32 = ffn_forward(x, *p32)
    jax.block_until_ready(out_f32)
    assert out_f32.shape == (batch, n_classes)
    assert jnp.allclose(out_f32, ref, atol=1e-5, rtol=1e-5)

    # bf16-fed MXU path (v5e/v6e/v7x throughput): f32 accumulate + f32 epilogue.
    pbf = prepare_ffn_params(w1, b1, w2, b2, use_bf16=True)
    out_bf16 = ffn_forward(x, *pbf)
    jax.block_until_ready(out_bf16)
    assert out_bf16.shape == (batch, n_classes)
    assert jnp.allclose(out_bf16, ref, atol=2e-2, rtol=2e-2)
    assert bool(jnp.all((out_bf16 >= 0.0) & (out_bf16 <= 1.0)))

    # Ragged batch: exercises the cdiv grid + masked last tile (no batch pad).
    x_ragged = x[:50]
    out_ragged = ffn_forward(x_ragged, *p32)
    jax.block_until_ready(out_ragged)
    assert out_ragged.shape == (50, n_classes)
    assert jnp.allclose(out_ragged, ref[:50], atol=1e-5, rtol=1e-5)

    print("KERNEL_OK")
</pallas_src>

<mosaic_0001>
module attributes {stable_mosaic.version = 11 : i64} {
  func.func @ffn_kernel(%arg0: i32, %arg1: memref<16x32xf32, #tpu.memory_space<vmem>>, %arg2: memref<32x128xf32, #tpu.memory_space<vmem>>, %arg3: memref<1x128xf32, #tpu.memory_space<vmem>>, %arg4: memref<128x4xf32, #tpu.memory_space<vmem>>, %arg5: memref<1x4xf32, #tpu.memory_space<vmem>>, %arg6: memref<16x4xf32, #tpu.memory_space<vmem>>) attributes {dimension_semantics = [#tpu.dimension_semantics<parallel>], iteration_bounds = array<i64: 4>, scalar_prefetch = 0 : i64, scratch_operands = 0 : i64, tpu.core_type = #tpu.core_type<tc>, window_params = [{transform_indices = @transform_0, window_bounds = array<i64: 16, 32>}, {pipeline_mode = #tpu.pipeline_mode<synchronous>, transform_indices = @transform_1, window_bounds = array<i64: 32, 128>}, {pipeline_mode = #tpu.pipeline_mode<synchronous>, transform_indices = @transform_2, window_bounds = array<i64: 1, 128>}, {pipeline_mode = #tpu.pipeline_mode<synchronous>, transform_indices = @transform_3, window_bounds = array<i64: 128, 4>}, {pipeline_mode = #tpu.pipeline_mode<synchronous>, transform_indices = @transform_4, window_bounds = array<i64: 1, 4>}, {transform_indices = @transform_5, window_bounds = array<i64: 16, 4>}]} {
    %c0 = arith.constant 0 : index
    %c0_0 = arith.constant 0 : index
    %0 = vector.load %arg1[%c0, %c0_0] : memref<16x32xf32, #tpu.memory_space<vmem>>, vector<16x32xf32>
    %c0_1 = arith.constant 0 : index
    %c0_2 = arith.constant 0 : index
    %1 = vector.load %arg2[%c0_1, %c0_2] : memref<32x128xf32, #tpu.memory_space<vmem>>, vector<32x128xf32>
    %cst = arith.constant dense<0.000000e+00> : vector<16x128xf32>
    %2 = tpu.matmul %0, %1, %cst {dimension_numbers = #tpu.dot_dimension_numbers<[1], [0], [0], [1], [0, 0, 1, 1], [], []>} : vector<16x32xf32>, vector<32x128xf32>, vector<16x128xf32> -> vector<16x128xf32>
    %c0_3 = arith.constant 0 : index
    %c0_4 = arith.constant 0 : index
    %3 = vector.load %arg3[%c0_3, %c0_4] : memref<1x128xf32, #tpu.memory_space<vmem>>, vector<1x128xf32>
    %4 = vector.broadcast %3 : vector<1x128xf32> to vector<16x128xf32>
    %5 = arith.addf %2, %4 : vector<16x128xf32>
    %cst_5 = arith.constant 0.000000e+00 : f32
    %6 = vector.broadcast %cst_5 : f32 to vector<16x128xf32>
    %7 = arith.maximumf %5, %6 : vector<16x128xf32>
    %c0_6 = arith.constant 0 : index
    %c0_7 = arith.constant 0 : index
    %8 = vector.load %arg4[%c0_6, %c0_7] : memref<128x4xf32, #tpu.memory_space<vmem>>, vector<128x4xf32>
    %cst_8 = arith.constant dense<0.000000e+00> : vector<16x4xf32>
    %9 = tpu.matmul %7, %8, %cst_8 {dimension_numbers = #tpu.dot_dimension_numbers<[1], [0], [0], [1], [0, 0, 1, 1], [], []>} : vector<16x128xf32>, vector<128x4xf32>, vector<16x4xf32> -> vector<16x4xf32>
    %c0_9 = arith.constant 0 : index
    %c0_10 = arith.constant 0 : index
    %10 = vector.load %arg5[%c0_9, %c0_10] : memref<1x4xf32, #tpu.memory_space<vmem>>, vector<1x4xf32>
    %11 = vector.broadcast %10 : vector<1x4xf32> to vector<16x4xf32>
    %12 = arith.addf %9, %11 : vector<16x4xf32>
    %13 = arith.negf %12 : vector<16x4xf32>
    %14 = math.exp %13 : vector<16x4xf32>
    %cst_11 = arith.constant 1.000000e+00 : f32
    %15 = vector.broadcast %cst_11 : f32 to vector<16x4xf32>
    %16 = arith.addf %15, %14 : vector<16x4xf32>
    %17 = arith.divf %15, %16 : vector<16x4xf32>
    %c0_12 = arith.constant 0 : index
    %c0_13 = arith.constant 0 : index
    %18 = vector.load %arg6[%c0_12, %c0_13] : memref<16x4xf32, #tpu.memory_space<vmem>>, vector<16x4xf32>
    tpu.vector_store %arg6[%c0_12, %c0_13], %17 {strides = array<i32>} : memref<16x4xf32, #tpu.memory_space<vmem>>, vector<16x4xf32>,
    return
  }
  func.func @transform_0(%arg0: i32) -> (i32, i32) {
    %c0_i32 = arith.constant 0 : i32
    %c0_i32_0 = arith.constant 0 : i32
    return %arg0, %c0_i32 : i32, i32
  }
  func.func @transform_1(%arg0: i32) -> (i32, i32) {
    %c0_i32 = arith.constant 0 : i32
    %c0_i32_0 = arith.constant 0 : i32
    %c0_i32_1 = arith.constant 0 : i32
    return %c0_i32, %c0_i32_0 : i32, i32
  }
  func.func @transform_2(%arg0: i32) -> (i32, i32) {
    %c0_i32 = arith.constant 0 : i32
    %c0_i32_0 = arith.constant 0 : i32
    %c0_i32_1 = arith.constant 0 : i32
    return %c0_i32, %c0_i32_0 : i32, i32
  }
  func.func @transform_3(%arg0: i32) -> (i32, i32) {
    %c0_i32 = arith.constant 0 : i32
    %c0_i32_0 = arith.constant 0 : i32
    %c0_i32_1 = arith.constant 0 : i32
    return %c0_i32, %c0_i32_0 : i32, i32
  }
  func.func @transform_4(%arg0: i32) -> (i32, i32) {
    %c0_i32 = arith.constant 0 : i32
    %c0_i32_0 = arith.constant 0 : i32
    %c0_i32_1 = arith.constant 0 : i32
    return %c0_i32, %c0_i32_0 : i32, i32
  }
  func.func @transform_5(%arg0: i32) -> (i32, i32) {
    %c0_i32 = arith.constant 0 : i32
    %c0_i32_0 = arith.constant 0 : i32
    return %arg0, %c0_i32 : i32, i32
  }
}

module attributes {stable_mosaic.version = 11 : i64} {
  func.func @ffn_kernel(%arg0: i32, %arg1: memref<16x32xf32, #tpu.memory_space<vmem>>, %arg2: memref<32x128xf32, #tpu.memory_space<vmem>>, %arg3: memref<1x128xf32, #tpu.memory_space<vmem>>, %arg4: memref<128x4xf32, #tpu.memory_space<vmem>>, %arg5: memref<1x4xf32, #tpu.memory_space<vmem>>, %arg6: memref<16x4xf32, #tpu.memory_space<vmem>>) attributes {dimension_semantics = [#tpu.dimension_semantics<parallel>], iteration_bounds = array<i64: 4>, scalar_prefetch = 0 : i64, scratch_operands = 0 : i64, tpu.core_type = #tpu.core_type<tc>, window_params = [{transform_indices = @transform_0, window_bounds = array<i64: 16, 32>}, {pipeline_mode = #tpu.pipeline_mode<synchronous>, transform_indices = @transform_1, window_bounds = array<i64: 32, 128>}, {pipeline_mode = #tpu.pipeline_mode<synchronous>, transform_indices = @transform_2, window_bounds = array<i64: 1, 128>}, {pipeline_mode = #tpu.pipeline_mode<synchronous>, transform_indices = @transform_3, window_bounds = array<i64: 128, 4>}, {pipeline_mode = #tpu.pipeline_mode<synchronous>, transform_indices = @transform_4, window_bounds = array<i64: 1, 4>}, {transform_indices = @transform_5, window_bounds = array<i64: 16, 4>}]} {
    %c0 = arith.constant 0 : index
    %c0_0 = arith.constant 0 : index
    %0 = vector.load %arg1[%c0, %c0_0] : memref<16x32xf32, #tpu.memory_space<vmem>>, vector<16x32xf32>
    %c0_1 = arith.constant 0 : index
    %c0_2 = arith.constant 0 : index
    %1 = vector.load %arg2[%c0_1, %c0_2] : memref<32x128xf32, #tpu.memory_space<vmem>>, vector<32x128xf32>
    %cst = arith.constant dense<0.000000e+00> : vector<16x128xf32>
    %2 = tpu.matmul %0, %1, %cst {dimension_numbers = #tpu.dot_dimension_numbers<[1], [0], [0], [1], [0, 0, 1, 1], [], []>} : vector<16x32xf32>, vector<32x128xf32>, vector<16x128xf32> -> vector<16x128xf32>
    %c0_3 = arith.constant 0 : index
    %c0_4 = arith.constant 0 : index
    %3 = vector.load %arg3[%c0_3, %c0_4] : memref<1x128xf32, #tpu.memory_space<vmem>>, vector<1x128xf32>
    %4 = vector.broadcast %3 : vector<1x128xf32> to vector<16x128xf32>
    %5 = arith.addf %2, %4 : vector<16x128xf32>
    %cst_5 = arith.constant 0.000000e+00 : f32
    %6 = vector.broadcast %cst_5 : f32 to vector<16x128xf32>
    %7 = arith.maximumf %5, %6 : vector<16x128xf32>
    %c0_6 = arith.constant 0 : index
    %c0_7 = arith.constant 0 : index
    %8 = vector.load %arg4[%c0_6, %c0_7] : memref<128x4xf32, #tpu.memory_space<vmem>>, vector<128x4xf32>
    %cst_8 = arith.constant dense<0.000000e+00> : vector<16x4xf32>
    %9 = tpu.matmul %7, %8, %cst_8 {dimension_numbers = #tpu.dot_dimension_numbers<[1], [0], [0], [1], [0, 0, 1, 1], [], []>} : vector<16x128xf32>, vector<128x4xf32>, vector<16x4xf32> -> vector<16x4xf32>
    %c0_9 = arith.constant 0 : index
    %c0_10 = arith.constant 0 : index
    %10 = vector.load %arg5[%c0_9, %c0_10] : memref<1x4xf32, #tpu.memory_space<vmem>>, vector<1x4xf32>
    %11 = vector.broadcast %10 : vector<1x4xf32> to vector<16x4xf32>
    %12 = arith.addf %9, %11 : vector<16x4xf32>
    %13 = arith.negf %12 : vector<16x4xf32>
    %14 = math.exp %13 : vector<16x4xf32>
    %cst_11 = arith.constant 1.000000e+00 : f32
    %15 = vector.broadcast %cst_11 : f32 to vector<16x4xf32>
    %16 = arith.addf %15, %14 : vector<16x4xf32>
    %17 = arith.divf %15, %16 : vector<16x4xf32>
    %c0_12 = arith.constant 0 : index
    %c0_13 = arith.constant 0 : index
    %18 = vector.load %arg6[%c0_12, %c0_13] : memref<16x4xf32, #tpu.memory_space<vmem>>, vector<16x4xf32>
    tpu.vector_store %arg6[%c0_12, %c0_13], %17 {strides = array<i32>} : memref<16x4xf32, #tpu.memory_space<vmem>>, vector<16x4xf32>,
    return
  }
  func.func @transform_0(%arg0: i32) -> (i32, i32) {
    %c0_i32 = arith.constant 0 : i32
    %c0_i32_0 = arith.constant 0 : i32
    return %arg0, %c0_i32 : i32, i32
  }
  func.func @transform_1(%arg0: i32) -> (i32, i32) {
    %c0_i32 = arith.constant 0 : i32
    %c0_i32_0 = arith.constant 0 : i32
    %c0_i32_1 = arith.constant 0 : i32
    return %c0_i32, %c0_i32_0 : i32, i32
  }
  func.func @transform_2(%arg0: i32) -> (i32, i32) {
    %c0_i32 = arith.constant 0 : i32
    %c0_i32_0 = arith.constant 0 : i32
    %c0_i32_1 = arith.constant 0 : i32
    return %c0_i32, %c0_i32_0 : i32, i32
  }
  func.func @transform_3(%arg0: i32) -> (i32, i32) {
    %c0_i32 = arith.constant 0 : i32
    %c0_i32_0 = arith.constant 0 : i32
    %c0_i32_1 = arith.constant 0 : i32
    return %c0_i32, %c0_i32_0 : i32, i32
  }
  func.func @transform_4(%arg0: i32) -> (i32, i32) {
    %c0_i32 = arith.constant 0 : i32
    %c0_i32_0 = arith.constant 0 : i32
    %c0_i32_1 = arith.constant 0 : i32
    return %c0_i32, %c0_i32_0 : i32, i32
  }
  func.func @transform_5(%arg0: i32) -> (i32, i32) {
    %c0_i32 = arith.constant 0 : i32
    %c0_i32_0 = arith.constant 0 : i32
    return %arg0, %c0_i32 : i32, i32
  }
}

</mosaic_0001>

<llo_original>
// kernel: _pallas_ffn.1
$region0: #{_pallas_ffn.1}
  #allocation0 [shape = 'u32[]', space=smem, size = 0x4, offset = 0x4, fixed_abs, tag = 'smem constant byte address 0x4 - core index']
  #allocation1 [shape = 'u32[72,128]{1,0:T(1,128)}', space=vmem, size = 0x9000, scoped, tag = 'internal scratch']
  %s0 = inlined_call_operand.vmem [shape: f32[64,32], index: 0, kind: input, shape index: {}]
  %s1 = inlined_call_operand.vmem [shape: f32[32,128], index: 1, kind: input, shape index: {}]
  %s2 = inlined_call_operand.vmem [shape: f32[1,128], index: 2, kind: input, shape index: {}]
  %s3 = inlined_call_operand.vmem [shape: f32[128,4], index: 3, kind: input, shape index: {}]
  %s4 = inlined_call_operand.vmem [shape: f32[1,4], index: 4, kind: input, shape index: {}]
  %s5 = inlined_call_operand.vmem [shape: f32[64,4], index: 5, kind: output, shape index: {}]
  %s6 = sld [smem:[#allocation0]]
  $region53: #{_pallas_ffn.1} parent=0
    _
  %s8 = ssub.s32 1, %s6
  %s9 = scalar_select 0, %s8, %s6
  loop: start=0, step=1, limit=6
  $region2: #{_pallas_ffn.1} parent=0 // loop_pre_header
    _
  $region3: #{_pallas_ffn.1} parent=0 // loop_header
    %s11 = sphi 0, %s15
    %p12 = scmp.ge.s32.totalorder %s11, 6
    %s21 = sphi 0, %s23
    %s24 = sphi 0, %s21
    %s25 = sphi 0, %s24
    %s41 = sphi 0, %s25
    %s45 = sphi 0, %s45
    %s47 = sphi 0, %s45
    %s48 = sphi 0, %s47
    %s62 = sphi 0, %s48
    %s66 = sphi 0, %s66
    %s68 = sphi 0, %s66
    %s69 = sphi 0, %s68
    %s83 = sphi 0, %s69
    %s87 = sphi 0, %s87
    %s89 = sphi 0, %s87
    %s90 = sphi 0, %s89
    %s104 = sphi 0, %s90
    %s108 = sphi 0, %s108
    %s110 = sphi 0, %s108
    %s111 = sphi 0, %s110
    %s125 = sphi 0, %s111
    %s131 = sphi 0, %s133
    %s134 = sphi 0, %s131
    %s135 = sphi 0, %s134
    %s151 = sphi 0, %s135
  $region4: #{_pallas_ffn.1} parent=0 // loop_header_branch
    %14 = sbr.rel (%p12) target = $region8
  $region5: #{_pallas_ffn.1} parent=0 // loop_body
    %s16 = ssub.s32 %s11, 1
    %s17 = ssub.s32 %s11, 2
    %s18 = sadd.s32 %s11, 1
    %s19 = ssub.s32 %s11, %s18
    %p20 = scmp.eq.s32.totalorder %s19, 0
    %s22 = sadd.s32 %s21, 1
    %s23 = scalar_select %p20, %s21, %s22
    %p26 = pneg %p20
    %p27 = scmp.eq.s32.totalorder %s11, 3
    %p28 = por %p26, %p27
    %p29 = scmp.ne.s32.totalorder %s21, %s24
    %p30 = scmp.eq.s32.totalorder %s11, 0
    %p31 = por %p29, %p30
    %p32 = scmp.ne.s32.totalorder %s21, %s24
    %p33 = scmp.eq.s32.totalorder %s16, 3
    %p34 = por %p32, %p33
    %p35 = scmp.ne.s32.totalorder %s24, %s25
    %p36 = scmp.eq.s32.totalorder %s16, 0
    %p37 = por %p35, %p36
    %p38 = scmp.ne.s32.totalorder %s24, %s25
    %p39 = scmp.eq.s32.totalorder %s17, 3
    %p40 = por %p38, %p39
    %p42 = scmp.ne.s32.totalorder %s25, %s41
    %p43 = scmp.eq.s32.totalorder %s17, 0
    %p44 = por %p42, %p43
    %s46 = sadd.s32 %s45, 1
    %p49 = scmp.eq.s32.totalorder %s11, 3
    %p50 = scmp.ne.s32.totalorder %s45, %s47
    %p51 = scmp.eq.s32.totalorder %s11, 0
    %p52 = por %p50, %p51
    %p53 = scmp.ne.s32.totalorder %s45, %s47
    %p54 = scmp.eq.s32.totalorder %s16, 3
    %p55 = por %p53, %p54
    %p56 = scmp.ne.s32.totalorder %s47, %s48
    %p57 = scmp.eq.s32.totalorder %s16, 0
    %p58 = por %p56, %p57
    %p59 = scmp.ne.s32.totalorder %s47, %s48
    %p60 = scmp.eq.s32.totalorder %s17, 3
    %p61 = por %p59, %p60
    %p63 = scmp.ne.s32.totalorder %s48, %s62
    %p64 = scmp.eq.s32.totalorder %s17, 0
    %p65 = por %p63, %p64
    %s67 = sadd.s32 %s66, 1
    %p70 = scmp.eq.s32.totalorder %s11, 3
    %p71 = scmp.ne.s32.totalorder %s66, %s68
    %p72 = scmp.eq.s32.totalorder %s11, 0
    %p73 = por %p71, %p72
    %p74 = scmp.ne.s32.totalorder %s66, %s68
    %p75 = scmp.eq.s32.totalorder %s16, 3
    %p76 = por %p74, %p75
    %p77 = scmp.ne.s32.totalorder %s68, %s69
    %p78 = scmp.eq.s32.totalorder %s16, 0
    %p79 = por %p77, %p78
    %p80 = scmp.ne.s32.totalorder %s68, %s69
    %p81 = scmp.eq.s32.totalorder %s17, 3
    %p82 = por %p80, %p81
    %p84 = scmp.ne.s32.totalorder %s69, %s83
    %p85 = scmp.eq.s32.totalorder %s17, 0
    %p86 = por %p84, %p85
    %s88 = sadd.s32 %s87, 1
    %p91 = scmp.eq.s32.totalorder %s11, 3
    %p92 = scmp.ne.s32.totalorder %s87, %s89
    %p93 = scmp.eq.s32.totalorder %s11, 0
    %p94 = por %p92, %p93
    %p95 = scmp.ne.s32.totalorder %s87, %s89
    %p96 = scmp.eq.s32.totalorder %s16, 3
    %p97 = por %p95, %p96
    %p98 = scmp.ne.s32.totalorder %s89, %s90
    %p99 = scmp.eq.s32.totalorder %s16, 0
    %p100 = por %p98, %p99
    %p101 = scmp.ne.s32.totalorder %s89, %s90
    %p102 = scmp.eq.s32.totalorder %s17, 3
    %p103 = por %p101, %p102
    %p105 = scmp.ne.s32.totalorder %s90, %s104
    %p106 = scmp.eq.s32.totalorder %s17, 0
    %p107 = por %p105, %p106
    %s109 = sadd.s32 %s108, 1
    %p112 = scmp.eq.s32.totalorder %s11, 3
    %p113 = scmp.ne.s32.totalorder %s108, %s110
    %p114 = scmp.eq.s32.totalorder %s11, 0
    %p115 = por %p113, %p114
    %p116 = scmp.ne.s32.totalorder %s108, %s110
    %p117 = scmp.eq.s32.totalorder %s16, 3
    %p118 = por %p116, %p117
    %p119 = scmp.ne.s32.totalorder %s110, %s111
    %p120 = scmp.eq.s32.totalorder %s16, 0
    %p121 = por %p119, %p120
    %p122 = scmp.ne.s32.totalorder %s110, %s111
    %p123 = scmp.eq.s32.totalorder %s17, 3
    %p124 = por %p122, %p123
    %p126 = scmp.ne.s32.totalorder %s111, %s125
    %p127 = scmp.eq.s32.totalorder %s17, 0
    %p128 = por %p126, %p127
    %s129 = ssub.s32 %s11, %s18
    %p130 = scmp.eq.s32.totalorder %s129, 0
    %s132 = sadd.s32 %s131, 1
    %s133 = scalar_select %p130, %s131, %s132
    %p136 = pneg %p130
    %p137 = scmp.eq.s32.totalorder %s11, 3
    %p138 = por %p136, %p137
    %p139 = scmp.ne.s32.totalorder %s131, %s134
    %p140 = scmp.eq.s32.totalorder %s11, 0
    %p141 = por %p139, %p140
    %p142 = scmp.ne.s32.totalorder %s131, %s134
    %p143 = scmp.eq.s32.totalorder %s16, 3
    %p144 = por %p142, %p143
    %p145 = scmp.ne.s32.totalorder %s134, %s135
    %p146 = scmp.eq.s32.totalorder %s16, 0
    %p147 = por %p145, %p146
    %p148 = scmp.ne.s32.totalorder %s134, %s135
    %p149 = scmp.eq.s32.totalorder %s17, 3
    %p150 = por %p148, %p149
    %p152 = scmp.ne.s32.totalorder %s135, %s151
    %p153 = scmp.eq.s32.totalorder %s17, 0
    %p154 = por %p152, %p153
    %p155 = scmp.le.s32.totalorder 1, %s11
    %p156 = scmp.lt.s32.totalorder %s11, 5
    %p157 = pnand %p155, %p156
    %p158 = pneg %p157
    // Predicated region
    $region9: #{_pallas_ffn.1} parent=5 // pred_check
      _
    $region10: #{_pallas_ffn.1} parent=5 // pred_check_branch
      %160 = sbr.rel (%p157) target = $region12
    $region11: #{_pallas_ffn.1} parent=5 // pred_region
      %s161 = ssub.s32 %s11, 1
      // Predicated region
      $region13: #{_pallas_ffn.1} parent=11 // pred_check
        %p162 = pneg %p58
      $region14: #{_pallas_ffn.1} parent=11 // pred_check_branch
        %164 = sbr.rel (%p162) target = $region16
      $region15: #{_pallas_ffn.1} parent=11 // pred_region
        _
      $region16: #{_pallas_ffn.1} parent=11 // pred_fallthru
        _
      // Predicated region
      $region17: #{_pallas_ffn.1} parent=11 // pred_check
        %p165 = pneg %p79
      $region18: #{_pallas_ffn.1} parent=11 // pred_check_branch
        %167 = sbr.rel (%p165) target = $region20
      $region19: #{_pallas_ffn.1} parent=11 // pred_region
        _
      $region20: #{_pallas_ffn.1} parent=11 // pred_fallthru
        _
      // Predicated region
      $region21: #{_pallas_ffn.1} parent=11 // pred_check
        %p168 = pneg %p100
      $region22: #{_pallas_ffn.1} parent=11 // pred_check_branch
        %170 = sbr.rel (%p168) target = $region24
      $region23: #{_pallas_ffn.1} parent=11 // pred_region
        _
      $region24: #{_pallas_ffn.1} parent=11 // pred_fallthru
        _
      // Predicated region
      $region25: #{_pallas_ffn.1} parent=11 // pred_check
        %p171 = pneg %p121
      $region26: #{_pallas_ffn.1} parent=11 // pred_check_branch
        %173 = sbr.rel (%p171) target = $region28
      $region27: #{_pallas_ffn.1} parent=11 // pred_region
        _
      $region28: #{_pallas_ffn.1} parent=11 // pred_fallthru
        _
    $region12: #{_pallas_ffn.1} parent=5 // pred_fallthru
      _
    %p174 = scmp.lt.s32.totalorder %s11, 4
    // Predicated region
    $region29: #{_pallas_ffn.1} parent=5 // pred_check
      %p175 = pneg %p174
    $region30: #{_pallas_ffn.1} parent=5 // pred_check_branch
      %177 = sbr.rel (%p175) target = $region32
    $region31: #{_pallas_ffn.1} parent=5 // pred_region
      // Predicated region
      $region33: #{_pallas_ffn.1} parent=31 // pred_check
        %p178 = pneg %p31
      $region34: #{_pallas_ffn.1} parent=31 // pred_check_branch
        %180 = sbr.rel (%p178) target = $region36
      $region35: #{_pallas_ffn.1} parent=31 // pred_region
        %s181 = smul.u32 2, %s11
        %p182 = scmp.lt.s32.totalorder %s181, 7
        %s183 = scalar_select %p182, %s181, 7
        %s184 = smul.addr %s183, 8
        %s185 = scalar_lea.vmem %s0, %s184
        %s186 = smul.u32 2, %s11
      $region36: #{_pallas_ffn.1} parent=31 // pred_fallthru
        _
    $region32: #{_pallas_ffn.1} parent=5 // pred_fallthru
      _
    %p187 = scmp.le.s32.totalorder 1, %s11
    %p188 = scmp.lt.s32.totalorder %s11, 5
    %p189 = pnand %p187, %p188
    %p190 = pneg %p189
    // Predicated region
    $region37: #{_pallas_ffn.1} parent=5 // pred_check
      _
    $region38: #{_pallas_ffn.1} parent=5 // pred_check_branch
      %192 = sbr.rel (%p189) target = $region40
    $region39: #{_pallas_ffn.1} parent=5 // pred_region
      %s193 = ssub.s32 %s11, 1
      %s194 = smul.u32 2, %s16
      %p195 = scmp.lt.s32.totalorder %s194, 7
      %s196 = scalar_select %p195, %s194, 7
      %s197 = smul.addr %s196, 8
      %s198 = scalar_lea.vmem %s0, %s197
      %p199 = pneg %p37
      %p200 = pneg %p34
      %p201 = pneg %p58
      %p202 = pneg %p55
      %p203 = pneg %p79
      %p204 = pneg %p76
      %p205 = pneg %p100
      %p206 = pneg %p97
      %p207 = pneg %p121
      %p208 = pneg %p118
      %p209 = pneg %p147
      %p210 = pneg %p144
      %s211 = smul.u32 2, %s16
      %p212 = scmp.lt.s32.totalorder %s211, 7
      %s213 = scalar_select %p212, %s211, 7
      %s214 = smul.addr %s213, 8
      %s215 = scalar_lea.vmem %s5, %s214
      %s216 = smul.u32 2, %s16
      %p217 = scmp.lt.s32.totalorder %s216, 7
      %s218 = scalar_select %p217, %s216, 7
      %s219 = smul.addr %s218, 8
      %s220 = scalar_lea.vmem %s0, %s219
      %s221 = smul.u32 2, %s16
      %s222 = smul.u32 2, %s16
      %p223 = scmp.lt.s32.totalorder %s222, 7
      %s224 = scalar_select %p223, %s222, 7
      %s225 = smul.addr %s224, 8
      %s226 = scalar_lea.vmem %s5, %s225
      %s227 = smul.u32 2, %s16
      %v228 = vld [vmem:[%s220] sm:$0xff]
      %v229 = vld [vmem:[%s220 + $0x8] sm:$0xff]
      %v230 = vld [vmem:[%s1] sm:$0xff]
      %v231 = vld [vmem:[%s1 + $0x8] sm:$0xff]
      %v232 = vld [vmem:[%s1 + $0x10] sm:$0xff]
      %v233 = vld [vmem:[%s1 + $0x18] sm:$0xff]
      %v234 = vld [vmem:[%s2] sm:$0x1]
      %v236 = vperm.slane %v234, 0
      %vm238 = vcmask 261120
      %v240 = vsel %vm238, %v228, 0
      %v243 = vsel %vm238, %v229, 0
      %245 = vmatpush.msra.mxu0 0.0
      %246 = vmatpush.msra.mxu0 0.0
      %247 = vmatpush.msra.mxu0 0.0
      %248 = vmatpush.msra.mxu0 0.0
      %249 = vmatpush.msra.mxu0 0.0
      %250 = vmatpush.msra.mxu0 0.0
      %251 = vmatpush.msra.mxu0 0.0
      %252 = vmatpush.msra.mxu0 0.0
      %253 = vmatpush.msra.mxu0 0.0
      %254 = vmatpush.msra.mxu0 0.0
      %255 = vmatpush.msra.mxu0 0.0
      %256 = vmatpush.msra.mxu0 0.0
      %257 = vmatpush.msra.mxu0 %v233
      %258 = vmatpush.msra.mxu0 %v232
      %259 = vmatpush.msra.mxu0 %v231
      %260 = vmatpush.msra.mxu0 %v230
      %261 = vmatmul.f32.gmra.mxu0 %v240
      %v262 = vpop.f32.mrf.mxu0
      %v263 = vadd.f32 %v236, %v262
      %264 = vmatmul.f32.gmra.mxu0 %v243
      %v265 = vpop.f32.mrf.mxu0
      %v266 = vadd.f32 %v236, %v265
      %267 = vdwg.mxu0
      %v268 = vmax.f32 %v263, 0.0
      %v269 = vmax.f32 %v266, 0.0
      %v270 = vld [vmem:[%s3] sm:$0xff]
      %v271 = vld [vmem:[%s3 + $0x8] sm:$0xff]
      %v272 = vld [vmem:[%s3 + $0x10] sm:$0xff]
      %v273 = vld [vmem:[%s3 + $0x18] sm:$0xff]
      %v274 = vld [vmem:[%s3 + $0x20] sm:$0xff]
      %v275 = vld [vmem:[%s3 + $0x28] sm:$0xff]
      %v276 = vld [vmem:[%s3 + $0x30] sm:$0xff]
      %v277 = vld [vmem:[%s3 + $0x38] sm:$0xff]
      %v278 = vld [vmem:[%s3 + $0x40] sm:$0xff]
      %v279 = vld [vmem:[%s3 + $0x48] sm:$0xff]
      %v280 = vld [vmem:[%s3 + $0x50] sm:$0xff]
      %v281 = vld [vmem:[%s3 + $0x58] sm:$0xff]
      %v282 = vld [vmem:[%s3 + $0x60] sm:$0xff]
      %v283 = vld [vmem:[%s3 + $0x68] sm:$0xff]
      %v284 = vld [vmem:[%s3 + $0x70] sm:$0xff]
      %v285 = vld [vmem:[%s3 + $0x78] sm:$0xff]
      %v286 = vld [vmem:[%s4] sm:$0x1]
      %v288 = vperm.slane %v286, 0
      %290 = vmatpush.msra.mxu0 %v285
      %291 = vmatpush.msra.mxu0 %v284
      %292 = vmatpush.msra.mxu0 %v283
      %293 = vmatpush.msra.mxu0 %v282
      %294 = vmatpush.msra.mxu0 %v281
      %295 = vmatpush.msra.mxu0 %v280
      %296 = vmatpush.msra.mxu0 %v279
      %297 = vmatpush.msra.mxu0 %v278
      %298 = vmatpush.msra.mxu0 %v277
      %299 = vmatpush.msra.mxu0 %v276
      %300 = vmatpush.msra.mxu0 %v275
      %301 = vmatpush.msra.mxu0 %v274
      %302 = vmatpush.msra.mxu0 %v273
      %303 = vmatpush.msra.mxu0 %v272
      %304 = vmatpush.msra.mxu0 %v271
      %305 = vmatpush.msra.mxu0 %v270
      %306 = vmatmul.f32.gmra.mxu0 %v268
      %v307 = vpop.f32.mrf.mxu0
      %v308 = vadd.f32 %v288, %v307
      %309 = vmatmul.f32.gmra.mxu0 %v269
      %v310 = vpop.f32.mrf.mxu0
      %v311 = vadd.f32 %v288, %v310
      %312 = vdwg.mxu0
      %v313 = vxor.u32 %v308, 2147483648
      %v314 = vxor.u32 %v311, 2147483648
      %v315 = vmul.f32 %v313, 1.442695
      %v316 = vpow.pop %v315
      %v317 = vmul.f32 %v314, 1.442695
      %v318 = vpow.pop %v317
      %v319 = vadd.f32 %v316, 1.0
      %v320 = vadd.f32 %v318, 1.0
      %v321 = vrcp.pop %v319
      %v322 = vmul.f32 %v319, %v321
      %v323 = vsub.f32 1.0, %v322
      %v324 = vmul.f32 %v321, %v323
      %v325 = vadd.f32 %v321, %v324
      %vm326 = vweird.f32 %v319
      %vm327 = vweird.f32 %v321
      %vm328 = vmor %vm326, %vm327
      %v329 = vsel %vm328, %v321, %v325
      %v330 = vand.u32 2147483647, %v319
      %vm331 = vcmp.eq.f32.partialorder %v330, 8.507059e+37
      %v332 = vand.u32 %v319, 2147483648
      %v333 = vor.u32 1.1754944e-38, %v332
      %v334 = vsel %vm331, %v333, %v329
      %v335 = vmul.f32 1.0, %v334
      %v336 = vrcp.pop %v320
      %v337 = vmul.f32 %v320, %v336
      %v338 = vsub.f32 1.0, %v337
      %v339 = vmul.f32 %v336, %v338
      %v340 = vadd.f32 %v336, %v339
      %vm341 = vweird.f32 %v320
      %vm342 = vweird.f32 %v336
      %vm343 = vmor %vm341, %vm342
      %v344 = vsel %vm343, %v336, %v340
      %v345 = vand.u32 2147483647, %v320
      %vm346 = vcmp.eq.f32.partialorder %v345, 8.507059e+37
      %v347 = vand.u32 %v320, 2147483648
      %v348 = vor.u32 1.1754944e-38, %v347
      %v349 = vsel %vm346, %v348, %v344
      %v350 = vmul.f32 1.0, %v349
      %vm351 = vcmask 31744
      %352 = vst.msk [vmem:[%s226] sm:$0xff] %vm351, %v335
      %353 = vst.msk [vmem:[%s226 + $0x8] sm:$0xff] %vm351, %v350
      %s354 = smul.u32 2, %s16
      %p355 = scmp.lt.s32.totalorder %s354, 7
      %s356 = scalar_select %p355, %s354, 7
      %s357 = smul.addr %s356, 8
      %s358 = scalar_lea.vmem %s5, %s357
      // Predicated region
      $region41: #{_pallas_ffn.1} parent=39 // pred_check
        %p359 = pneg %p144
      $region42: #{_pallas_ffn.1} parent=39 // pred_check_branch
        %361 = sbr.rel (%p359) target = $region44
      $region43: #{_pallas_ffn.1} parent=39 // pred_region
        %s362 = smul.u32 2, %s16
      $region44: #{_pallas_ffn.1} parent=39 // pred_fallthru
        _
    $region40: #{_pallas_ffn.1} parent=5 // pred_fallthru
      _
    %p363 = scmp.le.s32.totalorder 2, %s11
    // Predicated region
    $region45: #{_pallas_ffn.1} parent=5 // pred_check
      %p364 = pneg %p363
    $region46: #{_pallas_ffn.1} parent=5 // pred_check_branch
      %366 = sbr.rel (%p364) target = $region48
    $region47: #{_pallas_ffn.1} parent=5 // pred_region
      %s367 = ssub.s32 %s11, 2
      // Predicated region
      $region49: #{_pallas_ffn.1} parent=47 // pred_check
        %p368 = pneg %p150
      $region50: #{_pallas_ffn.1} parent=47 // pred_check_branch
        %370 = sbr.rel (%p368) target = $region52
      $region51: #{_pallas_ffn.1} parent=47 // pred_region
        %s371 = smul.u32 2, %s17
        %p372 = scmp.lt.s32.totalorder %s371, 7
        %s373 = scalar_select %p372, %s371, 7
        %s374 = smul.addr %s373, 8
        %s375 = scalar_lea.vmem %s5, %s374
      $region52: #{_pallas_ffn.1} parent=47 // pred_fallthru
        _
    $region48: #{_pallas_ffn.1} parent=5 // pred_fallthru
      _
  $region6: #{_pallas_ffn.1} parent=0 // loop_footer
    %s15 = sadd.s32 1, %s11
  $region7: #{_pallas_ffn.1} parent=0 // loop_footer_branch
    %10 = sbr.rel target = $region3
  $region8: #{_pallas_ffn.1} parent=0 // loop_exit
    _

// kernel: _pallas_ffn.1
$region0: #{_pallas_ffn.1}
  #allocation0 [shape = 'u32[]', space=smem, size = 0x4, offset = 0x4, fixed_abs, tag = 'smem constant byte address 0x4 - core index']
  #allocation1 [shape = 'u32[72,128]{1,0:T(1,128)}', space=vmem, size = 0x9000, scoped, tag = 'internal scratch']
  %s0 = inlined_call_operand.vmem [shape: f32[64,32], index: 0, kind: input, shape index: {}]
  %s1 = inlined_call_operand.vmem [shape: f32[32,128], index: 1, kind: input, shape index: {}]
  %s2 = inlined_call_operand.vmem [shape: f32[1,128], index: 2, kind: input, shape index: {}]
  %s3 = inlined_call_operand.vmem [shape: f32[128,4], index: 3, kind: input, shape index: {}]
  %s4 = inlined_call_operand.vmem [shape: f32[1,4], index: 4, kind: input, shape index: {}]
  %s5 = inlined_call_operand.vmem [shape: f32[64,4], index: 5, kind: output, shape index: {}]
  %s6 = sld [smem:[#allocation0]]
  $region53: #{_pallas_ffn.1} parent=0
    _
  %s8 = ssub.s32 1, %s6
  %s9 = scalar_select 0, %s8, %s6
  loop: start=0, step=1, limit=6
  $region2: #{_pallas_ffn.1} parent=0 // loop_pre_header
    _
  $region3: #{_pallas_ffn.1} parent=0 // loop_header
    %s11 = sphi 0, %s15
    %p12 = scmp.ge.s32.totalorder %s11, 6
    %s21 = sphi 0, %s23
    %s24 = sphi 0, %s21
    %s25 = sphi 0, %s24
    %s41 = sphi 0, %s25
    %s45 = sphi 0, %s45
    %s47 = sphi 0, %s45
    %s48 = sphi 0, %s47
    %s62 = sphi 0, %s48
    %s66 = sphi 0, %s66
    %s68 = sphi 0, %s66
    %s69 = sphi 0, %s68
    %s83 = sphi 0, %s69
    %s87 = sphi 0, %s87
    %s89 = sphi 0, %s87
    %s90 = sphi 0, %s89
    %s104 = sphi 0, %s90
    %s108 = sphi 0, %s108
    %s110 = sphi 0, %s108
    %s111 = sphi 0, %s110
    %s125 = sphi 0, %s111
    %s131 = sphi 0, %s133
    %s134 = sphi 0, %s131
    %s135 = sphi 0, %s134
    %s151 = sphi 0, %s135
  $region4: #{_pallas_ffn.1} parent=0 // loop_header_branch
    %14 = sbr.rel (%p12) target = $region8
  $region5: #{_pallas_ffn.1} parent=0 // loop_body
    %s16 = ssub.s32 %s11, 1
    %s17 = ssub.s32 %s11, 2
    %s18 = sadd.s32 %s11, 1
    %s19 = ssub.s32 %s11, %s18
    %p20 = scmp.eq.s32.totalorder %s19, 0
    %s22 = sadd.s32 %s21, 1
    %s23 = scalar_select %p20, %s21, %s22
    %p26 = pneg %p20
    %p27 = scmp.eq.s32.totalorder %s11, 3
    %p28 = por %p26, %p27
    %p29 = scmp.ne.s32.totalorder %s21, %s24
    %p30 = scmp.eq.s32.totalorder %s11, 0
    %p31 = por %p29, %p30
    %p32 = scmp.ne.s32.totalorder %s21, %s24
    %p33 = scmp.eq.s32.totalorder %s16, 3
    %p34 = por %p32, %p33
    %p35 = scmp.ne.s32.totalorder %s24, %s25
    %p36 = scmp.eq.s32.totalorder %s16, 0
    %p37 = por %p35, %p36
    %p38 = scmp.ne.s32.totalorder %s24, %s25
    %p39 = scmp.eq.s32.totalorder %s17, 3
    %p40 = por %p38, %p39
    %p42 = scmp.ne.s32.totalorder %s25, %s41
    %p43 = scmp.eq.s32.totalorder %s17, 0
    %p44 = por %p42, %p43
    %s46 = sadd.s32 %s45, 1
    %p49 = scmp.eq.s32.totalorder %s11, 3
    %p50 = scmp.ne.s32.totalorder %s45, %s47
    %p51 = scmp.eq.s32.totalorder %s11, 0
    %p52 = por %p50, %p51
    %p53 = scmp.ne.s32.totalorder %s45, %s47
    %p54 = scmp.eq.s32.totalorder %s16, 3
    %p55 = por %p53, %p54
    %p56 = scmp.ne.s32.totalorder %s47, %s48
    %p57 = scmp.eq.s32.totalorder %s16, 0
    %p58 = por %p56, %p57
    %p59 = scmp.ne.s32.totalorder %s47, %s48
    %p60 = scmp.eq.s32.totalorder %s17, 3
    %p61 = por %p59, %p60
    %p63 = scmp.ne.s32.totalorder %s48, %s62
    %p64 = scmp.eq.s32.totalorder %s17, 0
    %p65 = por %p63, %p64
    %s67 = sadd.s32 %s66, 1
    %p70 = scmp.eq.s32.totalorder %s11, 3
    %p71 = scmp.ne.s32.totalorder %s66, %s68
    %p72 = scmp.eq.s32.totalorder %s11, 0
    %p73 = por %p71, %p72
    %p74 = scmp.ne.s32.totalorder %s66, %s68
    %p75 = scmp.eq.s32.totalorder %s16, 3
    %p76 = por %p74, %p75
    %p77 = scmp.ne.s32.totalorder %s68, %s69
    %p78 = scmp.eq.s32.totalorder %s16, 0
    %p79 = por %p77, %p78
    %p80 = scmp.ne.s32.totalorder %s68, %s69
    %p81 = scmp.eq.s32.totalorder %s17, 3
    %p82 = por %p80, %p81
    %p84 = scmp.ne.s32.totalorder %s69, %s83
    %p85 = scmp.eq.s32.totalorder %s17, 0
    %p86 = por %p84, %p85
    %s88 = sadd.s32 %s87, 1
    %p91 = scmp.eq.s32.totalorder %s11, 3
    %p92 = scmp.ne.s32.totalorder %s87, %s89
    %p93 = scmp.eq.s32.totalorder %s11, 0
    %p94 = por %p92, %p93
    %p95 = scmp.ne.s32.totalorder %s87, %s89
    %p96 = scmp.eq.s32.totalorder %s16, 3
    %p97 = por %p95, %p96
    %p98 = scmp.ne.s32.totalorder %s89, %s90
    %p99 = scmp.eq.s32.totalorder %s16, 0
    %p100 = por %p98, %p99
    %p101 = scmp.ne.s32.totalorder %s89, %s90
    %p102 = scmp.eq.s32.totalorder %s17, 3
    %p103 = por %p101, %p102
    %p105 = scmp.ne.s32.totalorder %s90, %s104
    %p106 = scmp.eq.s32.totalorder %s17, 0
    %p107 = por %p105, %p106
    %s109 = sadd.s32 %s108, 1
    %p112 = scmp.eq.s32.totalorder %s11, 3
    %p113 = scmp.ne.s32.totalorder %s108, %s110
    %p114 = scmp.eq.s32.totalorder %s11, 0
    %p115 = por %p113, %p114
    %p116 = scmp.ne.s32.totalorder %s108, %s110
    %p117 = scmp.eq.s32.totalorder %s16, 3
    %p118 = por %p116, %p117
    %p119 = scmp.ne.s32.totalorder %s110, %s111
    %p120 = scmp.eq.s32.totalorder %s16, 0
    %p121 = por %p119, %p120
    %p122 = scmp.ne.s32.totalorder %s110, %s111
    %p123 = scmp.eq.s32.totalorder %s17, 3
    %p124 = por %p122, %p123
    %p126 = scmp.ne.s32.totalorder %s111, %s125
    %p127 = scmp.eq.s32.totalorder %s17, 0
    %p128 = por %p126, %p127
    %s129 = ssub.s32 %s11, %s18
    %p130 = scmp.eq.s32.totalorder %s129, 0
    %s132 = sadd.s32 %s131, 1
    %s133 = scalar_select %p130, %s131, %s132
    %p136 = pneg %p130
    %p137 = scmp.eq.s32.totalorder %s11, 3
    %p138 = por %p136, %p137
    %p139 = scmp.ne.s32.totalorder %s131, %s134
    %p140 = scmp.eq.s32.totalorder %s11, 0
    %p141 = por %p139, %p140
    %p142 = scmp.ne.s32.totalorder %s131, %s134
    %p143 = scmp.eq.s32.totalorder %s16, 3
    %p144 = por %p142, %p143
    %p145 = scmp.ne.s32.totalorder %s134, %s135
    %p146 = scmp.eq.s32.totalorder %s16, 0
    %p147 = por %p145, %p146
    %p148 = scmp.ne.s32.totalorder %s134, %s135
    %p149 = scmp.eq.s32.totalorder %s17, 3
    %p150 = por %p148, %p149
    %p152 = scmp.ne.s32.totalorder %s135, %s151
    %p153 = scmp.eq.s32.totalorder %s17, 0
    %p154 = por %p152, %p153
    %p155 = scmp.le.s32.totalorder 1, %s11
    %p156 = scmp.lt.s32.totalorder %s11, 5
    %p157 = pnand %p155, %p156
    %p158 = pneg %p157
    // Predicated region
    $region9: #{_pallas_ffn.1} parent=5 // pred_check
      _
    $region10: #{_pallas_ffn.1} parent=5 // pred_check_branch
      %160 = sbr.rel (%p157) target = $region12
    $region11: #{_pallas_ffn.1} parent=5 // pred_region
      %s161 = ssub.s32 %s11, 1
      // Predicated region
      $region13: #{_pallas_ffn.1} parent=11 // pred_check
        %p162 = pneg %p58
      $region14: #{_pallas_ffn.1} parent=11 // pred_check_branch
        %164 = sbr.rel (%p162) target = $region16
      $region15: #{_pallas_ffn.1} parent=11 // pred_region
        _
      $region16: #{_pallas_ffn.1} parent=11 // pred_fallthru
        _
      // Predicated region
      $region17: #{_pallas_ffn.1} parent=11 // pred_check
        %p165 = pneg %p79
      $region18: #{_pallas_ffn.1} parent=11 // pred_check_branch
        %167 = sbr.rel (%p165) target = $region20
      $region19: #{_pallas_ffn.1} parent=11 // pred_region
        _
      $region20: #{_pallas_ffn.1} parent=11 // pred_fallthru
        _
      // Predicated region
      $region21: #{_pallas_ffn.1} parent=11 // pred_check
        %p168 = pneg %p100
      $region22: #{_pallas_ffn.1} parent=11 // pred_check_branch
        %170 = sbr.rel (%p168) target = $region24
      $region23: #{_pallas_ffn.1} parent=11 // pred_region
        _
      $region24: #{_pallas_ffn.1} parent=11 // pred_fallthru
        _
      // Predicated region
      $region25: #{_pallas_ffn.1} parent=11 // pred_check
        %p171 = pneg %p121
      $region26: #{_pallas_ffn.1} parent=11 // pred_check_branch
        %173 = sbr.rel (%p171) target = $region28
      $region27: #{_pallas_ffn.1} parent=11 // pred_region
        _
      $region28: #{_pallas_ffn.1} parent=11 // pred_fallthru
        _
    $region12: #{_pallas_ffn.1} parent=5 // pred_fallthru
      _
    %p174 = scmp.lt.s32.totalorder %s11, 4
    // Predicated region
    $region29: #{_pallas_ffn.1} parent=5 // pred_check
      %p175 = pneg %p174
    $region30: #{_pallas_ffn.1} parent=5 // pred_check_branch
      %177 = sbr.rel (%p175) target = $region32
    $region31: #{_pallas_ffn.1} parent=5 // pred_region
      // Predicated region
      $region33: #{_pallas_ffn.1} parent=31 // pred_check
        %p178 = pneg %p31
      $region34: #{_pallas_ffn.1} parent=31 // pred_check_branch
        %180 = sbr.rel (%p178) target = $region36
      $region35: #{_pallas_ffn.1} parent=31 // pred_region
        %s181 = smul.u32 2, %s11
        %p182 = scmp.lt.s32.totalorder %s181, 7
        %s183 = scalar_select %p182, %s181, 7
        %s184 = smul.addr %s183, 8
        %s185 = scalar_lea.vmem %s0, %s184
        %s186 = smul.u32 2, %s11
      $region36: #{_pallas_ffn.1} parent=31 // pred_fallthru
        _
    $region32: #{_pallas_ffn.1} parent=5 // pred_fallthru
      _
    %p187 = scmp.le.s32.totalorder 1, %s11
    %p188 = scmp.lt.s32.totalorder %s11, 5
    %p189 = pnand %p187, %p188
    %p190 = pneg %p189
    // Predicated region
    $region37: #{_pallas_ffn.1} parent=5 // pred_check
      _
    $region38: #{_pallas_ffn.1} parent=5 // pred_check_branch
      %192 = sbr.rel (%p189) target = $region40
    $region39: #{_pallas_ffn.1} parent=5 // pred_region
      %s193 = ssub.s32 %s11, 1
      %s194 = smul.u32 2, %s16
      %p195 = scmp.lt.s32.totalorder %s194, 7
      %s196 = scalar_select %p195, %s194, 7
      %s197 = smul.addr %s196, 8
      %s198 = scalar_lea.vmem %s0, %s197
      %p199 = pneg %p37
      %p200 = pneg %p34
      %p201 = pneg %p58
      %p202 = pneg %p55
      %p203 = pneg %p79
      %p204 = pneg %p76
      %p205 = pneg %p100
      %p206 = pneg %p97
      %p207 = pneg %p121
      %p208 = pneg %p118
      %p209 = pneg %p147
      %p210 = pneg %p144
      %s211 = smul.u32 2, %s16
      %p212 = scmp.lt.s32.totalorder %s211, 7
      %s213 = scalar_select %p212, %s211, 7
      %s214 = smul.addr %s213, 8
      %s215 = scalar_lea.vmem %s5, %s214
      %s216 = smul.u32 2, %s16
      %p217 = scmp.lt.s32.totalorder %s216, 7
      %s218 = scalar_select %p217, %s216, 7
      %s219 = smul.addr %s218, 8
      %s220 = scalar_lea.vmem %s0, %s219
      %s221 = smul.u32 2, %s16
      %s222 = smul.u32 2, %s16
      %p223 = scmp.lt.s32.totalorder %s222, 7
      %s224 = scalar_select %p223, %s222, 7
      %s225 = smul.addr %s224, 8
      %s226 = scalar_lea.vmem %s5, %s225
      %s227 = smul.u32 2, %s16
      %v228 = vld [vmem:[%s220] sm:$0xff]
      %v229 = vld [vmem:[%s220 + $0x8] sm:$0xff]
      %v230 = vld [vmem:[%s1] sm:$0xff]
      %v231 = vld [vmem:[%s1 + $0x8] sm:$0xff]
      %v232 = vld [vmem:[%s1 + $0x10] sm:$0xff]
      %v233 = vld [vmem:[%s1 + $0x18] sm:$0xff]
      %v234 = vld [vmem:[%s2] sm:$0x1]
      %v236 = vperm.slane %v234, 0
      %vm238 = vcmask 261120
      %v240 = vsel %vm238, %v228, 0
      %v243 = vsel %vm238, %v229, 0
      %245 = vmatpush.msra.mxu0 0.0
      %246 = vmatpush.msra.mxu0 0.0
      %247 = vmatpush.msra.mxu0 0.0
      %248 = vmatpush.msra.mxu0 0.0
      %249 = vmatpush.msra.mxu0 0.0
      %250 = vmatpush.msra.mxu0 0.0
      %251 = vmatpush.msra.mxu0 0.0
      %252 = vmatpush.msra.mxu0 0.0
      %253 = vmatpush.msra.mxu0 0.0
      %254 = vmatpush.msra.mxu0 0.0
      %255 = vmatpush.msra.mxu0 0.0
      %256 = vmatpush.msra.mxu0 0.0
      %257 = vmatpush.msra.mxu0 %v233
      %258 = vmatpush.msra.mxu0 %v232
      %259 = vmatpush.msra.mxu0 %v231
      %260 = vmatpush.msra.mxu0 %v230
      %261 = vmatmul.f32.gmra.mxu0 %v240
      %v262 = vpop.f32.mrf.mxu0
      %v263 = vadd.f32 %v236, %v262
      %264 = vmatmul.f32.gmra.mxu0 %v243
      %v265 = vpop.f32.mrf.mxu0
      %v266 = vadd.f32 %v236, %v265
      %267 = vdwg.mxu0
      %v268 = vmax.f32 %v263, 0.0
      %v269 = vmax.f32 %v266, 0.0
      %v270 = vld [vmem:[%s3] sm:$0xff]
      %v271 = vld [vmem:[%s3 + $0x8] sm:$0xff]
      %v272 = vld [vmem:[%s3 + $0x10] sm:$0xff]
      %v273 = vld [vmem:[%s3 + $0x18] sm:$0xff]
      %v274 = vld [vmem:[%s3 + $0x20] sm:$0xff]
      %v275 = vld [vmem:[%s3 + $0x28] sm:$0xff]
      %v276 = vld [vmem:[%s3 + $0x30] sm:$0xff]
      %v277 = vld [vmem:[%s3 + $0x38] sm:$0xff]
      %v278 = vld [vmem:[%s3 + $0x40] sm:$0xff]
      %v279 = vld [vmem:[%s3 + $0x48] sm:$0xff]
      %v280 = vld [vmem:[%s3 + $0x50] sm:$0xff]
      %v281 = vld [vmem:[%s3 + $0x58] sm:$0xff]
      %v282 = vld [vmem:[%s3 + $0x60] sm:$0xff]
      %v283 = vld [vmem:[%s3 + $0x68] sm:$0xff]
      %v284 = vld [vmem:[%s3 + $0x70] sm:$0xff]
      %v285 = vld [vmem:[%s3 + $0x78] sm:$0xff]
      %v286 = vld [vmem:[%s4] sm:$0x1]
      %v288 = vperm.slane %v286, 0
      %290 = vmatpush.msra.mxu0 %v285
      %291 = vmatpush.msra.mxu0 %v284
      %292 = vmatpush.msra.mxu0 %v283
      %293 = vmatpush.msra.mxu0 %v282
      %294 = vmatpush.msra.mxu0 %v281
      %295 = vmatpush.msra.mxu0 %v280
      %296 = vmatpush.msra.mxu0 %v279
      %297 = vmatpush.msra.mxu0 %v278
      %298 = vmatpush.msra.mxu0 %v277
      %299 = vmatpush.msra.mxu0 %v276
      %300 = vmatpush.msra.mxu0 %v275
      %301 = vmatpush.msra.mxu0 %v274
      %302 = vmatpush.msra.mxu0 %v273
      %303 = vmatpush.msra.mxu0 %v272
      %304 = vmatpush.msra.mxu0 %v271
      %305 = vmatpush.msra.mxu0 %v270
      %306 = vmatmul.f32.gmra.mxu0 %v268
      %v307 = vpop.f32.mrf.mxu0
      %v308 = vadd.f32 %v288, %v307
      %309 = vmatmul.f32.gmra.mxu0 %v269
      %v310 = vpop.f32.mrf.mxu0
      %v311 = vadd.f32 %v288, %v310
      %312 = vdwg.mxu0
      %v313 = vxor.u32 %v308, 2147483648
      %v314 = vxor.u32 %v311, 2147483648
      %v315 = vmul.f32 %v313, 1.442695
      %v316 = vpow.pop %v315
      %v317 = vmul.f32 %v314, 1.442695
      %v318 = vpow.pop %v317
      %v319 = vadd.f32 %v316, 1.0
      %v320 = vadd.f32 %v318, 1.0
      %v321 = vrcp.pop %v319
      %v322 = vmul.f32 %v319, %v321
      %v323 = vsub.f32 1.0, %v322
      %v324 = vmul.f32 %v321, %v323
      %v325 = vadd.f32 %v321, %v324
      %vm326 = vweird.f32 %v319
      %vm327 = vweird.f32 %v321
      %vm328 = vmor %vm326, %vm327
      %v329 = vsel %vm328, %v321, %v325
      %v330 = vand.u32 2147483647, %v319
      %vm331 = vcmp.eq.f32.partialorder %v330, 8.507059e+37
      %v332 = vand.u32 %v319, 2147483648
      %v333 = vor.u32 1.1754944e-38, %v332
      %v334 = vsel %vm331, %v333, %v329
      %v335 = vmul.f32 1.0, %v334
      %v336 = vrcp.pop %v320
      %v337 = vmul.f32 %v320, %v336
      %v338 = vsub.f32 1.0, %v337
      %v339 = vmul.f32 %v336, %v338
      %v340 = vadd.f32 %v336, %v339
      %vm341 = vweird.f32 %v320
      %vm342 = vweird.f32 %v336
      %vm343 = vmor %vm341, %vm342
      %v344 = vsel %vm343, %v336, %v340
      %v345 = vand.u32 2147483647, %v320
      %vm346 = vcmp.eq.f32.partialorder %v345, 8.507059e+37
      %v347 = vand.u32 %v320, 2147483648
      %v348 = vor.u32 1.1754944e-38, %v347
      %v349 = vsel %vm346, %v348, %v344
      %v350 = vmul.f32 1.0, %v349
      %vm351 = vcmask 31744
      %352 = vst.msk [vmem:[%s226] sm:$0xff] %vm351, %v335
      %353 = vst.msk [vmem:[%s226 + $0x8] sm:$0xff] %vm351, %v350
      %s354 = smul.u32 2, %s16
      %p355 = scmp.lt.s32.totalorder %s354, 7
      %s356 = scalar_select %p355, %s354, 7
      %s357 = smul.addr %s356, 8
      %s358 = scalar_lea.vmem %s5, %s357
      // Predicated region
      $region41: #{_pallas_ffn.1} parent=39 // pred_check
        %p359 = pneg %p144
      $region42: #{_pallas_ffn.1} parent=39 // pred_check_branch
        %361 = sbr.rel (%p359) target = $region44
      $region43: #{_pallas_ffn.1} parent=39 // pred_region
        %s362 = smul.u32 2, %s16
      $region44: #{_pallas_ffn.1} parent=39 // pred_fallthru
        _
    $region40: #{_pallas_ffn.1} parent=5 // pred_fallthru
      _
    %p363 = scmp.le.s32.totalorder 2, %s11
    // Predicated region
    $region45: #{_pallas_ffn.1} parent=5 // pred_check
      %p364 = pneg %p363
    $region46: #{_pallas_ffn.1} parent=5 // pred_check_branch
      %366 = sbr.rel (%p364) target = $region48
    $region47: #{_pallas_ffn.1} parent=5 // pred_region
      %s367 = ssub.s32 %s11, 2
      // Predicated region
      $region49: #{_pallas_ffn.1} parent=47 // pred_check
        %p368 = pneg %p150
      $region50: #{_pallas_ffn.1} parent=47 // pred_check_branch
        %370 = sbr.rel (%p368) target = $region52
      $region51: #{_pallas_ffn.1} parent=47 // pred_region
        %s371 = smul.u32 2, %s17
        %p372 = scmp.lt.s32.totalorder %s371, 7
        %s373 = scalar_select %p372, %s371, 7
        %s374 = smul.addr %s373, 8
        %s375 = scalar_lea.vmem %s5, %s374
      $region52: #{_pallas_ffn.1} parent=47 // pred_fallthru
        _
    $region48: #{_pallas_ffn.1} parent=5 // pred_fallthru
      _
  $region6: #{_pallas_ffn.1} parent=0 // loop_footer
    %s15 = sadd.s32 1, %s11
  $region7: #{_pallas_ffn.1} parent=0 // loop_footer_branch
    %10 = sbr.rel target = $region3
  $region8: #{_pallas_ffn.1} parent=0 // loop_exit
    _

</llo_original>
